<compile_context>
chip_gen: v7x
topology: tpu7x:2x2x1
jax: 0.10.0
libtpu: 0.0.40
codegen_flags: <defaults>
</compile_context>

<pallas_src>
import functools

import jax
import jax.numpy as jnp
from jax.experimental import pallas as pl
from jax.experimental.pallas import tpu as pltpu

# ---- model dimensions (fc1 = Linear(4*32, 1000) implies input length 16) ----
K = 5          # conv kernel size
L0 = 16        # input sequence length
L1 = 16        # length after conv1 (padding=2, stride=1)
P1 = 8         # length after pool1
P2 = 4         # length after pool2
C1 = 16        # conv1 out channels
C2 = 32        # conv2 out channels
H = 1000       # fc1 hidden (only appears inside the fused fc weight)
NUM_CLASSES = 10
NCP = 128      # classes, lane-padded
BATCH = 2

OFF1 = L1 * C1            # 256  (end of conv1 bias block)
OFF2 = OFF1 + P1 * C2     # 512  (end of conv2 bias block)
NB = OFF2 + NCP           # 640  (total concatenated bias lanes)


def simple_cnn_kernel(x_ref, w1_ref, w2_ref, wf_ref, b_ref, o_ref):
    f32 = jnp.float32
    x = x_ref[...]                                             # (bt, L0)
    b1 = b_ref[:, 0:OFF1]                                      # (1, 256)
    b2 = b_ref[:, OFF1:OFF2]                                   # (1, 256)
    bf = b_ref[:, OFF2:NB]                                     # (1, 128)

    # conv1 (Toeplitz matmul) + ReLU.  Column layout: even time steps occupy
    # lanes 0..127, odd time steps lanes 128..255 (baked into W1), so pool1 is
    # a single whole-vreg maximum of the two halves.
    h1 = jnp.maximum(
        jnp.dot(x, w1_ref[...], preferred_element_type=f32) + b1, 0.0)   # (bt, 256)
    p1 = jnp.maximum(h1[:, :P1 * C1], h1[:, P1 * C1:])                   # (bt, 128) idx s*C1+ci

    # conv2 (Toeplitz matmul) + ReLU + pool2 (same even/odd layout trick).
    h2 = jnp.maximum(
        jnp.dot(p1, w2_ref[...], preferred_element_type=f32) + b2, 0.0)  # (bt, 256)
    p2 = jnp.maximum(h2[:, :P2 * C2], h2[:, P2 * C2:])                   # (bt, 128) idx l*C2+c

    # TODO(synk): nn.Dropout() is stochastic in train mode; implemented here as
    # identity (eval-mode semantics), which also makes the fc1*fc2 fusion valid.

    # fused fc1∘fc2 (flatten permutation + H/NC padding absorbed into wf_ref).
    o_ref[...] = jnp.dot(p2, wf_ref[...], preferred_element_type=f32) + bf


def prepare_simple_cnn_params(params):
    """One-time weight preprocessing.  Call once, cache, reuse every forward."""
    w1, b1, w2, b2, wf1, bf1, wf2, bf2 = params
    hp = jax.lax.Precision.HIGHEST

    # conv1 -> Toeplitz: W1[j, t, co] = w1[co, 0, j - t + 2] (valid taps only).
    j = jnp.arange(L0)[:, None]
    t = jnp.arange(L1)[None, :]
    k1 = j - t + 2
    v1 = (k1 >= 0) & (k1 < K)
    w1_t = jnp.transpose(w1[:, 0, :], (1, 0))                            # (K, C1)
    W1_3d = jnp.where(v1[:, :, None], w1_t[jnp.clip(k1, 0, K - 1)], 0.0)  # (L0, L1, C1)
    # Even/odd time interleave so pool1 = max(lanes 0..127, lanes 128..255).
    perm1 = jnp.concatenate([jnp.arange(0, L1, 2), jnp.arange(1, L1, 2)])
    W1 = W1_3d[:, perm1, :].reshape(L0, L1 * C1)                          # (16, 256)
    B1 = jnp.tile(b1, L1)[None, :]                                        # (1, 256)

    # conv2 -> Toeplitz: rows j*C1+ci (pooled order), cols t*C2+co, then the
    # same even/odd column interleave for pool2.
    j2 = jnp.arange(P1)[:, None]
    t2 = jnp.arange(P1)[None, :]
    k2 = j2 - t2 + 2
    v2 = (k2 >= 0) & (k2 < K)
    w2_t = jnp.transpose(w2, (2, 1, 0))                                   # (K, C1, C2)
    W2_4d = jnp.where(v2[:, :, None, None], w2_t[jnp.clip(k2, 0, K - 1)], 0.0)  # (j, t, ci, co)
    W2_4d = jnp.transpose(W2_4d, (0, 2, 1, 3))                            # (j, ci, t, co)
    perm2 = jnp.concatenate([jnp.arange(0, P1, 2), jnp.arange(1, P1, 2)])
    W2 = W2_4d[:, :, perm2, :].reshape(P1 * C1, P1 * C2)                  # (128, 256)
    B2 = jnp.tile(b2, P1)[None, :]                                        # (1, 256)

    # fc1 ∘ fc2 fused (valid in eval mode: no ReLU, dropout = identity).
    # fc1 rows: PyTorch flatten index c*P2+l  ->  kernel index l*C2+c.
    NC = wf2.shape[0]
    Wf1 = jnp.transpose(wf1.reshape(H, C2, P2), (2, 1, 0)).reshape(P2 * C2, H)  # (128, 1000)
    Wf2T = jnp.transpose(wf2, (1, 0))                                     # (H, NC)
    Wf = jnp.dot(Wf1, Wf2T, precision=hp)                                 # (128, NC)
    Bf = jnp.dot(bf1, Wf2T, precision=hp) + bf2                           # (NC,)
    Wf = jnp.pad(Wf, ((0, 0), (0, NCP - NC)))                             # (128, 128)
    Bf = jnp.pad(Bf, (0, NCP - NC))[None, :]                              # (1, 128)

    biases = jnp.concatenate([B1, B2, Bf], axis=1)                        # (1, 640)
    return (W1, W2, Wf, biases)


@functools.partial(jax.jit, static_argnames=("num_classes", "batch_tile"))
def simple_cnn_forward(x, prepped, *, num_classes=NUM_CLASSES, batch_tile=None):
    """x: (B, 1, L0) float32; prepped: output of prepare_simple_cnn_params."""
    W1, W2, Wf, biases = prepped
    B = x.shape[0]

    # Batch tile: one grid step for tiny B; >= 2 steps for B > 16 so the
    # 'parallel' axis can shard across v7x's two TensorCores.
    if batch_tile is not None:
        bt = batch_tile
    elif B <= 16:
        bt = ((B + 7) // 8) * 8
    else:
        bt = min(128, ((-(-B // 2) + 7) // 8) * 8)
    B_pad = ((B + bt - 1) // bt) * bt

    x_flat = jnp.pad(x[:, 0, :], ((0, B_pad - B), (0, 0)))                # (B_pad, L0)

    out = pl.pallas_call(
        simple_cnn_kernel,
        out_shape=jax.ShapeDtypeStruct((B_pad, NCP), jnp.float32),
        grid=(B_pad // bt,),
        in_specs=[
            pl.BlockSpec((bt, L0), lambda i: (i, 0)),
            pl.BlockSpec((L0, L1 * C1), lambda i: (0, 0)),
            pl.BlockSpec((P1 * C1, P1 * C2), lambda i: (0, 0)),
            pl.BlockSpec((P2 * C2, NCP), lambda i: (0, 0)),
            pl.BlockSpec((1, NB), lambda i: (0, 0)),
        ],
        out_specs=pl.BlockSpec((bt, NCP), lambda i: (i, 0)),
        compiler_params=pltpu.CompilerParams(dimension_semantics=("parallel",)),
    )(x_flat, W1, W2, Wf, biases)
    return out[:B, :num_classes]


def reference_forward(x, params):
    """Pure-JAX reference mirroring the PyTorch module (eval-mode dropout)."""
    w1, b1, w2, b2, wf1, bf1, wf2, bf2 = params
    hp = jax.lax.Precision.HIGHEST

    def conv1d(x, w, b):   # x (B, Cin, L), w (Cout, Cin, K), pad=2
        xp = jnp.pad(x, ((0, 0), (0, 0), (2, 2)))
        Lout = xp.shape[2] - w.shape[2] + 1
        out = jnp.zeros((x.shape[0], w.shape[0], Lout), jnp.float32)
        for k in range(w.shape[2]):
            out = out + jnp.einsum('bcl,oc->bol', xp[:, :, k:k + Lout], w[:, :, k],
                                   precision=hp)
        return out + b[None, :, None]

    h = jnp.maximum(conv1d(x, w1, b1), 0.0)
    h = jnp.maximum(h[:, :, 0::2], h[:, :, 1::2])
    h = jnp.maximum(conv1d(h, w2, b2), 0.0)
    h = jnp.maximum(h[:, :, 0::2], h[:, :, 1::2])
    f = h.reshape(x.shape[0], -1)
    f = jnp.dot(f, wf1.T, precision=hp) + bf1
    return jnp.dot(f, wf2.T, precision=hp) + bf2


if __name__ == "__main__":
    key = jax.random.PRNGKey(0)
    ks = jax.random.split(key, 9)
    params = (
        0.20 * jax.random.normal(ks[0], (C1, 1, K), jnp.float32),        # conv1 weight
        0.10 * jax.random.normal(ks[1], (C1,), jnp.float32),             # conv1 bias
        0.10 * jax.random.normal(ks[2], (C2, C1, K), jnp.float32),       # conv2 weight
        0.10 * jax.random.normal(ks[3], (C2,), jnp.float32),             # conv2 bias
        0.05 * jax.random.normal(ks[4], (H, P2 * C2), jnp.float32),      # fc1 weight
        0.05 * jax.random.normal(ks[5], (H,), jnp.float32),              # fc1 bias
        0.05 * jax.random.normal(ks[6], (NUM_CLASSES, H), jnp.float32),  # fc2 weight
        0.05 * jax.random.normal(ks[7], (NUM_CLASSES,), jnp.float32),    # fc2 bias
    )
    x = jax.random.normal(ks[8], (BATCH, 1, L0), jnp.float32)

    # One-time preprocessing (cacheable across forward calls).
    prepped = jax.block_until_ready(prepare_simple_cnn_params(params))

    out = jax.block_until_ready(simple_cnn_forward(x, prepped))
    ref = jax.block_until_ready(reference_forward(x, params))

    assert out.shape == (BATCH, NUM_CLASSES), out.shape
    assert jnp.allclose(out, ref, rtol=2e-4, atol=2e-4), (
        f"max abs err = {jnp.max(jnp.abs(out - ref))}")
    print("KERNEL_OK")
</pallas_src>

<mosaic_0001>
module attributes {stable_mosaic.version = 11 : i64} {
  func.func @simple_cnn_kernel(%arg0: i32, %arg1: memref<8x16xf32, #tpu.memory_space<vmem>>, %arg2: memref<16x256xf32, #tpu.memory_space<vmem>>, %arg3: memref<128x256xf32, #tpu.memory_space<vmem>>, %arg4: memref<128x128xf32, #tpu.memory_space<vmem>>, %arg5: memref<1x640xf32, #tpu.memory_space<vmem>>, %arg6: memref<8x128xf32, #tpu.memory_space<vmem>>) attributes {dimension_semantics = [#tpu.dimension_semantics<parallel>], iteration_bounds = array<i64: 1>, scalar_prefetch = 0 : i64, scratch_operands = 0 : i64, tpu.core_type = #tpu.core_type<tc>, window_params = [{transform_indices = @transform_0, window_bounds = array<i64: 8, 16>}, {pipeline_mode = #tpu.pipeline_mode<synchronous>, transform_indices = @transform_1, window_bounds = array<i64: 16, 256>}, {pipeline_mode = #tpu.pipeline_mode<synchronous>, transform_indices = @transform_2, window_bounds = array<i64: 128, 256>}, {pipeline_mode = #tpu.pipeline_mode<synchronous>, transform_indices = @transform_3, window_bounds = array<i64: 128, 128>}, {pipeline_mode = #tpu.pipeline_mode<synchronous>, transform_indices = @transform_4, window_bounds = array<i64: 1, 640>}, {transform_indices = @transform_5, window_bounds = array<i64: 8, 128>}]} {
    %c0 = arith.constant 0 : index
    %c0_0 = arith.constant 0 : index
    %0 = vector.load %arg1[%c0, %c0_0] : memref<8x16xf32, #tpu.memory_space<vmem>>, vector<8x16xf32>
    %c0_1 = arith.constant 0 : index
    %c0_2 = arith.constant 0 : index
    %1 = vector.load %arg5[%c0_1, %c0_2] : memref<1x640xf32, #tpu.memory_space<vmem>>, vector<1x256xf32>
    %c0_3 = arith.constant 0 : index
    %c256 = arith.constant 256 : index
    %2 = vector.load %arg5[%c0_3, %c256] : memref<1x640xf32, #tpu.memory_space<vmem>>, vector<1x256xf32>
    %c0_4 = arith.constant 0 : index
    %c512 = arith.constant 512 : index
    %3 = vector.load %arg5[%c0_4, %c512] : memref<1x640xf32, #tpu.memory_space<vmem>>, vector<1x128xf32>
    %c0_5 = arith.constant 0 : index
    %c0_6 = arith.constant 0 : index
    %4 = vector.load %arg2[%c0_5, %c0_6] : memref<16x256xf32, #tpu.memory_space<vmem>>, vector<16x256xf32>
    %cst = arith.constant dense<0.000000e+00> : vector<8x256xf32>
    %5 = tpu.matmul %0, %4, %cst {dimension_numbers = #tpu.dot_dimension_numbers<[1], [0], [0], [1], [0, 0, 1, 1], [], []>} : vector<8x16xf32>, vector<16x256xf32>, vector<8x256xf32> -> vector<8x256xf32>
    %6 = vector.broadcast %1 : vector<1x256xf32> to vector<8x256xf32>
    %7 = arith.addf %5, %6 : vector<8x256xf32>
    %cst_7 = arith.constant 0.000000e+00 : f32
    %8 = vector.broadcast %cst_7 : f32 to vector<8x256xf32>
    %9 = arith.maximumf %7, %8 : vector<8x256xf32>
    %10 = vector.extract_strided_slice %9 {offsets = [0, 0], sizes = [8, 128], strides = [1, 1]} : vector<8x256xf32> to vector<8x128xf32>
    %11 = vector.extract_strided_slice %9 {offsets = [0, 128], sizes = [8, 128], strides = [1, 1]} : vector<8x256xf32> to vector<8x128xf32>
    %12 = arith.maximumf %10, %11 : vector<8x128xf32>
    %c0_8 = arith.constant 0 : index
    %c0_9 = arith.constant 0 : index
    %13 = vector.load %arg3[%c0_8, %c0_9] : memref<128x256xf32, #tpu.memory_space<vmem>>, vector<128x256xf32>
    %cst_10 = arith.constant dense<0.000000e+00> : vector<8x256xf32>
    %14 = tpu.matmul %12, %13, %cst_10 {dimension_numbers = #tpu.dot_dimension_numbers<[1], [0], [0], [1], [0, 0, 1, 1], [], []>} : vector<8x128xf32>, vector<128x256xf32>, vector<8x256xf32> -> vector<8x256xf32>
    %15 = vector.broadcast %2 : vector<1x256xf32> to vector<8x256xf32>
    %16 = arith.addf %14, %15 : vector<8x256xf32>
    %cst_11 = arith.constant 0.000000e+00 : f32
    %17 = vector.broadcast %cst_11 : f32 to vector<8x256xf32>
    %18 = arith.maximumf %16, %17 : vector<8x256xf32>
    %19 = vector.extract_strided_slice %18 {offsets = [0, 0], sizes = [8, 128], strides = [1, 1]} : vector<8x256xf32> to vector<8x128xf32>
    %20 = vector.extract_strided_slice %18 {offsets = [0, 128], sizes = [8, 128], strides = [1, 1]} : vector<8x256xf32> to vector<8x128xf32>
    %21 = arith.maximumf %19, %20 : vector<8x128xf32>
    %c0_12 = arith.constant 0 : index
    %c0_13 = arith.constant 0 : index
    %22 = vector.load %arg4[%c0_12, %c0_13] : memref<128x128xf32, #tpu.memory_space<vmem>>, vector<128x128xf32>
    %cst_14 = arith.constant dense<0.000000e+00> : vector<8x128xf32>
    %23 = tpu.matmul %21, %22, %cst_14 {dimension_numbers = #tpu.dot_dimension_numbers<[1], [0], [0], [1], [0, 0, 1, 1], [], []>} : vector<8x128xf32>, vector<128x128xf32>, vector<8x128xf32> -> vector<8x128xf32>
    %24 = vector.broadcast %3 : vector<1x128xf32> to vector<8x128xf32>
    %25 = arith.addf %23, %24 : vector<8x128xf32>
    %c0_15 = arith.constant 0 : index
    %c0_16 = arith.constant 0 : index
    %26 = vector.load %arg6[%c0_15, %c0_16] : memref<8x128xf32, #tpu.memory_space<vmem>>, vector<8x128xf32>
    tpu.vector_store %arg6[%c0_15, %c0_16], %25 {strides = array<i32>} : memref<8x128xf32, #tpu.memory_space<vmem>>, vector<8x128xf32>,
    return
  }
  func.func @transform_0(%arg0: i32) -> (i32, i32) {
    %c0_i32 = arith.constant 0 : i32
    %c0_i32_0 = arith.constant 0 : i32
    return %arg0, %c0_i32 : i32, i32
  }
  func.func @transform_1(%arg0: i32) -> (i32, i32) {
    %c0_i32 = arith.constant 0 : i32
    %c0_i32_0 = arith.constant 0 : i32
    %c0_i32_1 = arith.constant 0 : i32
    return %c0_i32, %c0_i32_0 : i32, i32
  }
  func.func @transform_2(%arg0: i32) -> (i32, i32) {
    %c0_i32 = arith.constant 0 : i32
    %c0_i32_0 = arith.constant 0 : i32
    %c0_i32_1 = arith.constant 0 : i32
    return %c0_i32, %c0_i32_0 : i32, i32
  }
  func.func @transform_3(%arg0: i32) -> (i32, i32) {
    %c0_i32 = arith.constant 0 : i32
    %c0_i32_0 = arith.constant 0 : i32
    %c0_i32_1 = arith.constant 0 : i32
    return %c0_i32, %c0_i32_0 : i32, i32
  }
  func.func @transform_4(%arg0: i32) -> (i32, i32) {
    %c0_i32 = arith.constant 0 : i32
    %c0_i32_0 = arith.constant 0 : i32
    %c0_i32_1 = arith.constant 0 : i32
    return %c0_i32, %c0_i32_0 : i32, i32
  }
  func.func @transform_5(%arg0: i32) -> (i32, i32) {
    %c0_i32 = arith.constant 0 : i32
    %c0_i32_0 = arith.constant 0 : i32
    return %arg0, %c0_i32 : i32, i32
  }
}

</mosaic_0001>

<llo_original>
// kernel: simple_cnn_forward.1
$region0: #{simple_cnn_forward.1}
  #allocation0 [shape = 'u32[]', space=smem, size = 0x4, offset = 0x4, fixed_abs, tag = 'smem constant byte address 0x4 - core index']
  #allocation1 [shape = 'u32[144,128]{1,0:T(1,128)}', space=vmem, size = 0x12000, scoped, tag = 'internal scratch']
  %s0 = inlined_call_operand.vmem [shape: f32[8,16], index: 0, kind: input, shape index: {}]
  %s1 = inlined_call_operand.hbm [shape: f32[16,256], index: 1, kind: input, shape index: {}]
  %s2 = inlined_call_operand.hbm [shape: f32[128,256], index: 2, kind: input, shape index: {}]
  %s3 = inlined_call_operand.hbm [shape: f32[128,128], index: 3, kind: input, shape index: {}]
  %s4 = inlined_call_operand.vmem [shape: f32[1,640], index: 4, kind: input, shape index: {}]
  %s5 = inlined_call_operand.vmem [shape: f32[8,128], index: 5, kind: output, shape index: {}]
  %s6 = sld [smem:[#allocation0]]
  $region42: #{simple_cnn_forward.1} parent=0
    _
  %s8 = ssub.s32 1, %s6
  %s9 = scalar_select 0, %s8, %s6
  $region1: #{simple_cnn_forward.1} parent=0
    #allocation2 [shape = 'u8[16384]{0}', space=vmem, size = 0x4000, scoped, tag = 'input window, operand 1, single buffered']
    #allocation3 [shape = 's32[1]{0}', space=sflag, size = 0x4, scoped, tag = 'scoped memory for simple_cnn_forward.1']
    #allocation4 [shape = 'u8[131072]{0}', space=vmem, size = 0x20000, scoped, tag = 'input window, operand 2, single buffered']
    #allocation5 [shape = 's32[1]{0}', space=sflag, size = 0x4, scoped, tag = 'scoped memory for simple_cnn_forward.1']
    #allocation6 [shape = 'u8[65536]{0}', space=vmem, size = 0x10000, scoped, tag = 'input window, operand 3, single buffered']
    %10 = vsyncpa [#allocation3], 0
    %11 = vsyncpa [#allocation5], 0
    // Predicated region
    $region2: #{simple_cnn_forward.1} parent=1 // pred_check
      _
    $region3: #{simple_cnn_forward.1} parent=1 // pred_check_branch
      %13 = sbr.rel (0) target = $region5
    $region4: #{simple_cnn_forward.1} parent=1 // pred_region
      _
    $region5: #{simple_cnn_forward.1} parent=1 // pred_fallthru
      _
    // Predicated region
    $region6: #{simple_cnn_forward.1} parent=1 // pred_check
      _
    $region7: #{simple_cnn_forward.1} parent=1 // pred_check_branch
      %15 = sbr.rel (0) target = $region9
    $region8: #{simple_cnn_forward.1} parent=1 // pred_region
      %s17 = ssub.s32 512, 512
      %18 = vsyncadd [#allocation3], %s17
      %s19 = sshll.u32 [#allocation2], 4
      %s20 = int_to_ptr.vmem [resolvable:$true] %s19
      %25 = dma.hbm_to_vmem [thread:$0]  %s1, 512, %s20, [#allocation3], 256, 256, 16
    $region9: #{simple_cnn_forward.1} parent=1 // pred_fallthru
      _
    // Predicated region
    $region10: #{simple_cnn_forward.1} parent=1 // pred_check
      _
    $region11: #{simple_cnn_forward.1} parent=1 // pred_check_branch
      %27 = sbr.rel (0) target = $region13
    $region12: #{simple_cnn_forward.1} parent=1 // pred_region
      %s29 = ssub.s32 4096, 4096
      %30 = vsyncadd [#allocation5], %s29
      %s31 = sshll.u32 [#allocation4], 4
      %s32 = int_to_ptr.vmem [resolvable:$true] %s31
      %37 = dma.hbm_to_vmem [thread:$0]  %s2, 4096, %s32, [#allocation5], 256, 256, 16
    $region13: #{simple_cnn_forward.1} parent=1 // pred_fallthru
      _
    // Predicated region
    $region14: #{simple_cnn_forward.1} parent=1 // pred_check
      _
    $region15: #{simple_cnn_forward.1} parent=1 // pred_check_branch
      %39 = sbr.rel (0) target = $region17
    $region16: #{simple_cnn_forward.1} parent=1 // pred_region
      %s41 = ssub.s32 2048, 2048
      %42 = vsyncadd [#allocation5], %s41
      %s43 = sshll.u32 [#allocation6], 4
      %s44 = int_to_ptr.vmem [resolvable:$true] %s43
      %49 = dma.hbm_to_vmem [thread:$0]  %s3, 2048, %s44, [#allocation5], 128, 128, 8
    $region17: #{simple_cnn_forward.1} parent=1 // pred_fallthru
      _
    // Predicated region
    $region18: #{simple_cnn_forward.1} parent=1 // pred_check
      _
    $region19: #{simple_cnn_forward.1} parent=1 // pred_check_branch
      %51 = sbr.rel (0) target = $region21
    $region20: #{simple_cnn_forward.1} parent=1 // pred_region
      _
    $region21: #{simple_cnn_forward.1} parent=1 // pred_fallthru
      _
    // Predicated region
    $region22: #{simple_cnn_forward.1} parent=1 // pred_check
      _
    $region23: #{simple_cnn_forward.1} parent=1 // pred_check_branch
      %53 = sbr.rel (0) target = $region25
    $region24: #{simple_cnn_forward.1} parent=1 // pred_region
      %54 = dma.done [#allocation3], 512
    $region25: #{simple_cnn_forward.1} parent=1 // pred_fallthru
      _
    // Predicated region
    $region26: #{simple_cnn_forward.1} parent=1 // pred_check
      _
    $region27: #{simple_cnn_forward.1} parent=1 // pred_check_branch
      %56 = sbr.rel (0) target = $region29
    $region28: #{simple_cnn_forward.1} parent=1 // pred_region
      %57 = dma.done [#allocation5], 4096
    $region29: #{simple_cnn_forward.1} parent=1 // pred_fallthru
      _
    // Predicated region
    $region30: #{simple_cnn_forward.1} parent=1 // pred_check
      _
    $region31: #{simple_cnn_forward.1} parent=1 // pred_check_branch
      %59 = sbr.rel (0) target = $region33
    $region32: #{simple_cnn_forward.1} parent=1 // pred_region
      %60 = dma.done [#allocation5], 2048
    $region33: #{simple_cnn_forward.1} parent=1 // pred_fallthru
      _
    %v61 = vld [vmem:[%s0] sm:$0xff]
    %v62 = vld [vmem:[%s4] sm:$0x3]
    %v63 = vld [vmem:[%s4 + $0x2] sm:$0x3]
    %v64 = vld [vmem:[%s4 + $0x4] sm:$0x1]
    %v65 = vld [vmem:[#allocation2] sm:$0xff]
    %v66 = vld [vmem:[#allocation2 + $0x8] sm:$0xff]
    %v67 = vld [vmem:[#allocation2 + $0x10] sm:$0xff]
    %v68 = vld [vmem:[#allocation2 + $0x18] sm:$0xff]
    %v70 = vlaneseq
    %v71 = vshrl.u32 %v70, 7
    %v72 = vsub.s32 0, %v71
    %v73 = vrot.slane %v62, %v72
    %v74 = vlaneseq
    %v75 = vshrl.u32 %v74, 7
    %v76 = vsub.s32 1, %v75
    %v77 = vrot.slane %v62, %v76
    %vm80 = vcmask 130048
    %v82 = vsel %vm80, %v61, 0
    %84 = vmatprep.subr.mxu0 %v66
    %85 = vmatpush1.msra.mxu0 %v65
    %86 = vmatprep.subr.mxu0 %v68
    %87 = vmatpush1.msra.mxu0 %v67
    %88 = vmatprep.subr.mxu0 0.0
    %89 = vmatpush1.msra.mxu0 0.0
    %90 = vmatprep.subr.mxu0 0.0
    %91 = vmatpush1.msra.mxu0 0.0
    %92 = vmatprep.subr.mxu0 0.0
    %93 = vmatpush1.msra.mxu0 0.0
    %94 = vmatprep.subr.mxu0 0.0
    %95 = vmatpush1.msra.mxu0 0.0
    %96 = vmatprep.subr.mxu0 0.0
    %97 = vmatpush1.msra.mxu0 0.0
    %98 = vmatprep.subr.mxu0 0.0
    %99 = vmatpush1.msra.mxu0 0.0
    %100 = vmatprep.subr.mxu0 0.0
    %101 = vmatpush1.msra.mxu0 0.0
    %102 = vmatprep.subr.mxu0 0.0
    %103 = vmatpush1.msra.mxu0 0.0
    %104 = vmatprep.subr.mxu0 0.0
    %105 = vmatpush1.msra.mxu0 0.0
    %106 = vmatprep.subr.mxu0 0.0
    %107 = vmatpush1.msra.mxu0 0.0
    %108 = vmatprep.subr.mxu0 0.0
    %109 = vmatpush1.msra.mxu0 0.0
    %110 = vmatprep.subr.mxu0 0.0
    %111 = vmatpush1.msra.mxu0 0.0
    %112 = vmatprep.subr.mxu0 0.0
    %113 = vmatpush1.msra.mxu0 0.0
    %114 = vmatprep.subr.mxu0 0.0
    %115 = vmatpush1.msra.mxu0 0.0
    %116 = vmatprep.subr.mxu0 0.0
    %117 = vmatpush1.msra.mxu0 0.0
    %118 = vmatprep.subr.mxu0 0.0
    %119 = vmatpush1.msra.mxu0 0.0
    %120 = vmatprep.subr.mxu0 0.0
    %121 = vmatpush1.msra.mxu0 0.0
    %122 = vmatprep.subr.mxu0 0.0
    %123 = vmatpush1.msra.mxu0 0.0
    %124 = vmatprep.subr.mxu0 0.0
    %125 = vmatpush1.msra.mxu0 0.0
    %126 = vmatprep.subr.mxu0 0.0
    %127 = vmatpush1.msra.mxu0 0.0
    %128 = vmatprep.subr.mxu0 0.0
    %129 = vmatpush1.msra.mxu0 0.0
    %130 = vmatprep.subr.mxu0 0.0
    %131 = vmatpush1.msra.mxu0 0.0
    %132 = vmatprep.subr.mxu0 0.0
    %133 = vmatpush1.msra.mxu0 0.0
    %134 = vmatprep.subr.mxu0 0.0
    %135 = vmatpush1.msra.mxu0 0.0
    %136 = vmatprep.subr.mxu0 0.0
    %137 = vmatpush1.msra.mxu0 0.0
    %138 = vmatprep.subr.mxu0 0.0
    %139 = vmatpush1.msra.mxu0 0.0
    %140 = vmatprep.subr.mxu0 0.0
    %141 = vmatpush1.msra.mxu0 0.0
    %142 = vmatprep.subr.mxu0 0.0
    %143 = vmatpush1.msra.mxu0 0.0
    %144 = vmatprep.subr.mxu0 0.0
    %145 = vmatpush1.msra.mxu0 0.0
    %146 = vmatprep.subr.mxu0 0.0
    %147 = vmatpush1.msra.mxu0 0.0
    %148 = vmatprep.mubr.f32.mxu0 0.0
    %149 = vmatmul.mubr.f32.gmra.mrb[0].mxu0 %v82
    %v150 = vpop.f32.mrb[0].mxu0
    %v151 = vadd.f32 %v73, %v150
    %v152 = vpop.f32.mrb[0].mxu0
    %v153 = vadd.f32 %v77, %v152
    %154 = vdwg.mxu0
    %v155 = vmax.f32 %v151, 0.0
    %v156 = vmax.f32 %v153, 0.0
    %v157 = vmax.f32 %v155, %v156
    %v158 = vld [vmem:[#allocation4] sm:$0xff]
    %v159 = vld [vmem:[#allocation4 + $0x8] sm:$0xff]
    %v160 = vld [vmem:[#allocation4 + $0x10] sm:$0xff]
    %v161 = vld [vmem:[#allocation4 + $0x18] sm:$0xff]
    %v162 = vld [vmem:[#allocation4 + $0x20] sm:$0xff]
    %v163 = vld [vmem:[#allocation4 + $0x28] sm:$0xff]
    %v164 = vld [vmem:[#allocation4 + $0x30] sm:$0xff]
    %v165 = vld [vmem:[#allocation4 + $0x38] sm:$0xff]
    %v166 = vld [vmem:[#allocation4 + $0x40] sm:$0xff]
    %v167 = vld [vmem:[#allocation4 + $0x48] sm:$0xff]
    %v168 = vld [vmem:[#allocation4 + $0x50] sm:$0xff]
    %v169 = vld [vmem:[#allocation4 + $0x58] sm:$0xff]
    %v170 = vld [vmem:[#allocation4 + $0x60] sm:$0xff]
    %v171 = vld [vmem:[#allocation4 + $0x68] sm:$0xff]
    %v172 = vld [vmem:[#allocation4 + $0x70] sm:$0xff]
    %v173 = vld [vmem:[#allocation4 + $0x78] sm:$0xff]
    %v174 = vld [vmem:[#allocation4 + $0x80] sm:$0xff]
    %v175 = vld [vmem:[#allocation4 + $0x88] sm:$0xff]
    %v176 = vld [vmem:[#allocation4 + $0x90] sm:$0xff]
    %v177 = vld [vmem:[#allocation4 + $0x98] sm:$0xff]
    %v178 = vld [vmem:[#allocation4 + $0xa0] sm:$0xff]
    %v179 = vld [vmem:[#allocation4 + $0xa8] sm:$0xff]
    %v180 = vld [vmem:[#allocation4 + $0xb0] sm:$0xff]
    %v181 = vld [vmem:[#allocation4 + $0xb8] sm:$0xff]
    %v182 = vld [vmem:[#allocation4 + $0xc0] sm:$0xff]
    %v183 = vld [vmem:[#allocation4 + $0xc8] sm:$0xff]
    %v184 = vld [vmem:[#allocation4 + $0xd0] sm:$0xff]
    %v185 = vld [vmem:[#allocation4 + $0xd8] sm:$0xff]
    %v186 = vld [vmem:[#allocation4 + $0xe0] sm:$0xff]
    %v187 = vld [vmem:[#allocation4 + $0xe8] sm:$0xff]
    %v188 = vld [vmem:[#allocation4 + $0xf0] sm:$0xff]
    %v189 = vld [vmem:[#allocation4 + $0xf8] sm:$0xff]
    %v191 = vlaneseq
    %v192 = vshrl.u32 %v191, 7
    %v193 = vsub.s32 0, %v192
    %v194 = vrot.slane %v63, %v193
    %v195 = vlaneseq
    %v196 = vshrl.u32 %v195, 7
    %v197 = vsub.s32 1, %v196
    %v198 = vrot.slane %v63, %v197
    %201 = vmatprep.subr.mxu0 %v159
    %202 = vmatpush1.msra.mxu0 %v158
    %203 = vmatprep.subr.mxu0 %v161
    %204 = vmatpush1.msra.mxu0 %v160
    %205 = vmatprep.subr.mxu0 %v163
    %206 = vmatpush1.msra.mxu0 %v162
    %207 = vmatprep.subr.mxu0 %v165
    %208 = vmatpush1.msra.mxu0 %v164
    %209 = vmatprep.subr.mxu0 %v167
    %210 = vmatpush1.msra.mxu0 %v166
    %211 = vmatprep.subr.mxu0 %v169
    %212 = vmatpush1.msra.mxu0 %v168
    %213 = vmatprep.subr.mxu0 %v171
    %214 = vmatpush1.msra.mxu0 %v170
    %215 = vmatprep.subr.mxu0 %v173
    %216 = vmatpush1.msra.mxu0 %v172
    %217 = vmatprep.subr.mxu0 %v175
    %218 = vmatpush1.msra.mxu0 %v174
    %219 = vmatprep.subr.mxu0 %v177
    %220 = vmatpush1.msra.mxu0 %v176
    %221 = vmatprep.subr.mxu0 %v179
    %222 = vmatpush1.msra.mxu0 %v178
    %223 = vmatprep.subr.mxu0 %v181
    %224 = vmatpush1.msra.mxu0 %v180
    %225 = vmatprep.subr.mxu0 %v183
    %226 = vmatpush1.msra.mxu0 %v182
    %227 = vmatprep.subr.mxu0 %v185
    %228 = vmatpush1.msra.mxu0 %v184
    %229 = vmatprep.subr.mxu0 %v187
    %230 = vmatpush1.msra.mxu0 %v186
    %231 = vmatprep.subr.mxu0 %v189
    %232 = vmatpush1.msra.mxu0 %v188
    %233 = vmatprep.subr.mxu0 0.0
    %234 = vmatpush1.msra.mxu0 0.0
    %235 = vmatprep.subr.mxu0 0.0
    %236 = vmatpush1.msra.mxu0 0.0
    %237 = vmatprep.subr.mxu0 0.0
    %238 = vmatpush1.msra.mxu0 0.0
    %239 = vmatprep.subr.mxu0 0.0
    %240 = vmatpush1.msra.mxu0 0.0
    %241 = vmatprep.subr.mxu0 0.0
    %242 = vmatpush1.msra.mxu0 0.0
    %243 = vmatprep.subr.mxu0 0.0
    %244 = vmatpush1.msra.mxu0 0.0
    %245 = vmatprep.subr.mxu0 0.0
    %246 = vmatpush1.msra.mxu0 0.0
    %247 = vmatprep.subr.mxu0 0.0
    %248 = vmatpush1.msra.mxu0 0.0
    %249 = vmatprep.subr.mxu0 0.0
    %250 = vmatpush1.msra.mxu0 0.0
    %251 = vmatprep.subr.mxu0 0.0
    %252 = vmatpush1.msra.mxu0 0.0
    %253 = vmatprep.subr.mxu0 0.0
    %254 = vmatpush1.msra.mxu0 0.0
    %255 = vmatprep.subr.mxu0 0.0
    %256 = vmatpush1.msra.mxu0 0.0
    %257 = vmatprep.subr.mxu0 0.0
    %258 = vmatpush1.msra.mxu0 0.0
    %259 = vmatprep.subr.mxu0 0.0
    %260 = vmatpush1.msra.mxu0 0.0
    %261 = vmatprep.subr.mxu0 0.0
    %262 = vmatpush1.msra.mxu0 0.0
    %263 = vmatprep.subr.mxu0 0.0
    %264 = vmatpush1.msra.mxu0 0.0
    %265 = vmatprep.mubr.f32.mxu0 0.0
    %266 = vmatmul.mubr.f32.gmra.mrb[0].mxu0 %v157
    %v267 = vpop.f32.mrb[0].mxu0
    %v268 = vadd.f32 %v194, %v267
    %v269 = vpop.f32.mrb[0].mxu0
    %v270 = vadd.f32 %v198, %v269
    %271 = vdwg.mxu0
    %v272 = vmax.f32 %v268, 0.0
    %v273 = vmax.f32 %v270, 0.0
    %v274 = vmax.f32 %v272, %v273
    %v275 = vld [vmem:[#allocation6] sm:$0xff]
    %v276 = vld [vmem:[#allocation6 + $0x8] sm:$0xff]
    %v277 = vld [vmem:[#allocation6 + $0x10] sm:$0xff]
    %v278 = vld [vmem:[#allocation6 + $0x18] sm:$0xff]
    %v279 = vld [vmem:[#allocation6 + $0x20] sm:$0xff]
    %v280 = vld [vmem:[#allocation6 + $0x28] sm:$0xff]
    %v281 = vld [vmem:[#allocation6 + $0x30] sm:$0xff]
    %v282 = vld [vmem:[#allocation6 + $0x38] sm:$0xff]
    %v283 = vld [vmem:[#allocation6 + $0x40] sm:$0xff]
    %v284 = vld [vmem:[#allocation6 + $0x48] sm:$0xff]
    %v285 = vld [vmem:[#allocation6 + $0x50] sm:$0xff]
    %v286 = vld [vmem:[#allocation6 + $0x58] sm:$0xff]
    %v287 = vld [vmem:[#allocation6 + $0x60] sm:$0xff]
    %v288 = vld [vmem:[#allocation6 + $0x68] sm:$0xff]
    %v289 = vld [vmem:[#allocation6 + $0x70] sm:$0xff]
    %v290 = vld [vmem:[#allocation6 + $0x78] sm:$0xff]
    %v292 = vlaneseq
    %v293 = vshrl.u32 %v292, 7
    %v294 = vsub.s32 0, %v293
    %v295 = vrot.slane %v64, %v294
    %297 = vmatprep.subr.mxu0 0.0
    %298 = vmatpush1.msra.mxu0 %v275
    %299 = vmatprep.subr.mxu0 0.0
    %300 = vmatpush1.msra.mxu0 %v276
    %301 = vmatprep.subr.mxu0 0.0
    %302 = vmatpush1.msra.mxu0 %v277
    %303 = vmatprep.subr.mxu0 0.0
    %304 = vmatpush1.msra.mxu0 %v278
    %305 = vmatprep.subr.mxu0 0.0
    %306 = vmatpush1.msra.mxu0 %v279
    %307 = vmatprep.subr.mxu0 0.0
    %308 = vmatpush1.msra.mxu0 %v280
    %309 = vmatprep.subr.mxu0 0.0
    %310 = vmatpush1.msra.mxu0 %v281
    %311 = vmatprep.subr.mxu0 0.0
    %312 = vmatpush1.msra.mxu0 %v282
    %313 = vmatprep.subr.mxu0 0.0
    %314 = vmatpush1.msra.mxu0 %v283
    %315 = vmatprep.subr.mxu0 0.0
    %316 = vmatpush1.msra.mxu0 %v284
    %317 = vmatprep.subr.mxu0 0.0
    %318 = vmatpush1.msra.mxu0 %v285
    %319 = vmatprep.subr.mxu0 0.0
    %320 = vmatpush1.msra.mxu0 %v286
    %321 = vmatprep.subr.mxu0 0.0
    %322 = vmatpush1.msra.mxu0 %v287
    %323 = vmatprep.subr.mxu0 0.0
    %324 = vmatpush1.msra.mxu0 %v288
    %325 = vmatprep.subr.mxu0 0.0
    %326 = vmatpush1.msra.mxu0 %v289
    %327 = vmatprep.subr.mxu0 0.0
    %328 = vmatpush1.msra.mxu0 %v290
    %329 = vmatprep.subr.mxu0 0.0
    %330 = vmatpush1.msra.mxu0 0.0
    %331 = vmatprep.subr.mxu0 0.0
    %332 = vmatpush1.msra.mxu0 0.0
    %333 = vmatprep.subr.mxu0 0.0
    %334 = vmatpush1.msra.mxu0 0.0
    %335 = vmatprep.subr.mxu0 0.0
    %336 = vmatpush1.msra.mxu0 0.0
    %337 = vmatprep.subr.mxu0 0.0
    %338 = vmatpush1.msra.mxu0 0.0
    %339 = vmatprep.subr.mxu0 0.0
    %340 = vmatpush1.msra.mxu0 0.0
    %341 = vmatprep.subr.mxu0 0.0
    %342 = vmatpush1.msra.mxu0 0.0
    %343 = vmatprep.subr.mxu0 0.0
    %344 = vmatpush1.msra.mxu0 0.0
    %345 = vmatprep.subr.mxu0 0.0
    %346 = vmatpush1.msra.mxu0 0.0
    %347 = vmatprep.subr.mxu0 0.0
    %348 = vmatpush1.msra.mxu0 0.0
    %349 = vmatprep.subr.mxu0 0.0
    %350 = vmatpush1.msra.mxu0 0.0
    %351 = vmatprep.subr.mxu0 0.0
    %352 = vmatpush1.msra.mxu0 0.0
    %353 = vmatprep.subr.mxu0 0.0
    %354 = vmatpush1.msra.mxu0 0.0
    %355 = vmatprep.subr.mxu0 0.0
    %356 = vmatpush1.msra.mxu0 0.0
    %357 = vmatprep.subr.mxu0 0.0
    %358 = vmatpush1.msra.mxu0 0.0
    %359 = vmatprep.subr.mxu0 0.0
    %360 = vmatpush1.msra.mxu0 0.0
    %361 = vmatprep.mubr.f32.mxu0 0.0
    %362 = vmatmul.mubr.f32.gmra.mrb[0].mxu0 %v274
    %v363 = vpop.f32.mrb[0].mxu0
    %v364 = vadd.f32 %v295, %v363
    %v365 = vpop.f32.mrb[0].mxu0
    %366 = vdwg.mxu0
    %367 = vst [vmem:[%s5] sm:$0xff] %v364
    // Predicated region
    $region34: #{simple_cnn_forward.1} parent=1 // pred_check
      _
    $region35: #{simple_cnn_forward.1} parent=1 // pred_check_branch
      %369 = sbr.rel (0) target = $region37
    $region36: #{simple_cnn_forward.1} parent=1 // pred_region
      _
    $region37: #{simple_cnn_forward.1} parent=1 // pred_fallthru
      _
    // Predicated region
    $region38: #{simple_cnn_forward.1} parent=1 // pred_check
      _
    $region39: #{simple_cnn_forward.1} parent=1 // pred_check_branch
      %371 = sbr.rel (0) target = $region41
    $region40: #{simple_cnn_forward.1} parent=1 // pred_region
      _
    $region41: #{simple_cnn_forward.1} parent=1 // pred_fallthru
      _
    %372 = vsyncpa [#allocation3], 1
    %373 = vsyncpa [#allocation5], 1

</llo_original>
